<compile_context>
chip_gen: v7x
topology: tpu7x:2x2x1
jax: 0.10.0
libtpu: 0.0.40
codegen_flags: <defaults>
</compile_context>

<pallas_src>
import functools

import jax
import jax.numpy as jnp
from jax.experimental import pallas as pl
from jax.experimental.pallas import tpu as pltpu

_MIB = 1024 * 1024


# ----------------------------------------------------------------------------
# Kernels
# ----------------------------------------------------------------------------
def _gnn_fused_kernel(a_ref, inv_ref, x_ref, w1_ref, b1_ref, w2_ref, b2_ref,
                      out_ref):
    """Both SAGEConv layers, everything VMEM-resident (small / medium graphs)."""
    a = a_ref[...]                 # (Np, Np) bf16 edge counts
    x = x_ref[...]                 # (Np, Hp) bf16 node features
    inv = inv_ref[...]             # (Np, 1)  f32 exact 1/deg

    # ---- layer 1: SAGEConv + ReLU ----
    agg1 = (jnp.dot(a, x, preferred_element_type=jnp.float32) * inv
            ).astype(jnp.bfloat16)
    h = (jnp.dot(jnp.concatenate([agg1, x], axis=-1), w1_ref[...],
                 preferred_element_type=jnp.float32) + b1_ref[...])
    h = jnp.maximum(h, 0.0).astype(jnp.bfloat16)

    # ---- layer 2: SAGEConv (no activation) ----
    agg2 = (jnp.dot(a, h, preferred_element_type=jnp.float32) * inv
            ).astype(jnp.bfloat16)
    out = (jnp.dot(jnp.concatenate([agg2, h], axis=-1), w2_ref[...],
                   preferred_element_type=jnp.float32) + b2_ref[...])
    out_ref[...] = out.astype(out_ref.dtype)


def _sage_layer_xres_kernel(a_ref, x_ref, inv_ref, w_ref, b_ref, out_ref,
                            acc_ref, *, relu, tm, tk):
    """One row-tile of one SAGEConv layer; x and 1/deg fully resident in VMEM.

    a_ref  : (TM, TK)        bf16 edge-count tile
    x_ref  : (Np, Hp)        bf16 node features (resident, read once per layer)
    inv_ref: (Np, 1)         f32 exact 1/deg (resident)
    w_ref  : (2*Hp, Hp)      bf16 stacked [Wl; Wr] (resident)
    b_ref  : (1, Hp)         f32
    out_ref: (TM, Hp)
    acc_ref: (TM, Hp)        f32 neighbor-sum accumulator (VMEM scratch)
    """
    i = pl.program_id(0)
    k = pl.program_id(1)

    @pl.when(k == 0)
    def _init():
        acc_ref[...] = jnp.zeros_like(acc_ref)

    col0 = pl.multiple_of(k * tk, 128)
    xk = x_ref[pl.ds(col0, tk), :]
    acc_ref[...] += jnp.dot(a_ref[...], xk, preferred_element_type=jnp.float32)

    @pl.when(k == pl.num_programs(1) - 1)
    def _finalize():
        row0 = pl.multiple_of(i * tm, 128)
        inv = inv_ref[pl.ds(row0, tm), :]
        xi = x_ref[pl.ds(row0, tm), :]
        agg = (acc_ref[...] * inv).astype(jnp.bfloat16)     # exact f32 mean
        y = (jnp.dot(jnp.concatenate([agg, xi], axis=-1), w_ref[...],
                     preferred_element_type=jnp.float32) + b_ref[...])
        if relu:
            y = jnp.maximum(y, 0.0)
        out_ref[...] = y.astype(out_ref.dtype)


def _sage_layer_stream_kernel(a_ref, xk_ref, xi_ref, inv_ref, w_ref, b_ref,
                              out_ref, acc_ref, *, relu):
    """Fallback when resident x would not fit VMEM: stream x column blocks."""
    k = pl.program_id(1)

    @pl.when(k == 0)
    def _init():
        acc_ref[...] = jnp.zeros_like(acc_ref)

    acc_ref[...] += jnp.dot(a_ref[...], xk_ref[...],
                            preferred_element_type=jnp.float32)

    @pl.when(k == pl.num_programs(1) - 1)
    def _finalize():
        agg = (acc_ref[...] * inv_ref[...]).astype(jnp.bfloat16)
        y = (jnp.dot(jnp.concatenate([agg, xi_ref[...]], axis=-1), w_ref[...],
                     preferred_element_type=jnp.float32) + b_ref[...])
        if relu:
            y = jnp.maximum(y, 0.0)
        out_ref[...] = y.astype(out_ref.dtype)


# ----------------------------------------------------------------------------
# Sizing helpers
# ----------------------------------------------------------------------------
def _round_up(v, m):
    return ((v + m - 1) // m) * m


def _pad2(a, rows, cols):
    return jnp.pad(a, ((0, rows - a.shape[0]), (0, cols - a.shape[1])))


def _vmem_capacity_bytes():
    """Per-core VMEM; conservative fallback = 64 MiB (v7x per-TensorCore)."""
    try:
        cap = int(pltpu.get_tpu_info().vmem_capacity_bytes)
        if cap > 0:
            return cap
    except Exception:
        pass
    return 64 * _MIB


def _fused_vmem_bytes(n_pad, h_pad):
    return int(n_pad * n_pad * 2                 # A (bf16)
               + n_pad * h_pad * 2               # x (bf16)
               + n_pad * 4                       # 1/deg (f32)
               + 2 * (2 * h_pad) * h_pad * 2     # stacked weights (bf16)
               + 2 * h_pad * 4                   # biases (f32)
               + n_pad * h_pad * 4               # out (f32)
               + 7 * n_pad * h_pad * 4)          # f32 / concat temporaries


def _tiled_vmem_bytes(tm, tk, n_pad, h_pad, x_resident):
    xbytes = n_pad * h_pad * 2 if x_resident else (tk + tm) * h_pad * 2
    inv_bytes = n_pad * 4 if x_resident else tm * 4
    per_step = (tm * tk * 2                      # A tile
                + xbytes                         # x
                + inv_bytes                      # 1/deg
                + (2 * h_pad) * h_pad * 2        # stacked weights
                + h_pad * 4                      # bias
                + tm * h_pad * 4)                # out tile
    return int(2 * per_step                      # double buffering
               + tm * h_pad * 4                  # f32 accumulator
               + tm * 2 * h_pad * 4)             # finalize temporaries


def _vmem_limit(estimate_bytes, cap_bytes):
    return int(min(max(2 * estimate_bytes, estimate_bytes + 2 * _MIB, 4 * _MIB),
                   cap_bytes))


def _choose_tiles(n):
    """Pick TM/TK (multiples of 128, TM<=512, TK<=1024) and the padded N."""
    n128 = _round_up(max(n, 1), 128)
    if n128 <= 512:
        return n128, n128, n128               # single tile each way
    n_pad = _round_up(n, 256)
    tm = 512 if n_pad % 512 == 0 else 256     # >=2 row blocks -> megacore-friendly
    if n_pad % 1024 == 0:
        tk = 1024
    elif n_pad % 512 == 0:
        tk = 512
    else:
        tk = 256
    return tm, tk, n_pad


# ----------------------------------------------------------------------------
# Forward pass
# ----------------------------------------------------------------------------
def gnn_forward(x, edge_index, params, *, force_tiled=False):
    """x: (N, H) float32, edge_index: (2, E) int32.  Returns (N, H) float32."""
    n, h = x.shape
    h_pad = _round_up(h, 128)
    wl1, wr1, b1, wl2, wr2, b2 = params

    vmem_cap = _vmem_capacity_bytes()
    fused_budget = (2 * vmem_cap) // 5        # ~40% of per-core VMEM
    limit_cap = (3 * vmem_cap) // 4           # ~75% of per-core VMEM

    n_pad_fused = _round_up(n, 128)           # lane-aligned MXU contraction dim
    fused = (not force_tiled) and (
        _fused_vmem_bytes(n_pad_fused, h_pad) <= fused_budget)

    if fused:
        tm = tk = n_pad = n_pad_fused
        x_resident = True
    else:
        tm, tk, n_pad = _choose_tiles(n)
        x_resident = (2 * n_pad * h_pad * 2) <= (vmem_cap // 4)
        if x_resident and _tiled_vmem_bytes(tm, tk, n_pad, h_pad, True) > limit_cap:
            x_resident = False

    # --- plain-JAX glue -------------------------------------------------------
    src, dst = edge_index[0], edge_index[1]
    # Padded bf16 edge-count adjacency built in one pass (2 B/elem HBM write).
    # NOTE: exact for up to 256 parallel edges per (dst, src) pair.
    a_p = jnp.zeros((n_pad, n_pad), jnp.bfloat16).at[dst, src].add(
        jnp.ones(dst.shape, jnp.bfloat16))
    # Exact in-degree / mean factor from an O(E) f32 scatter.
    deg = jnp.zeros((n,), jnp.float32).at[dst].add(1.0)
    inv_deg = (1.0 / jnp.maximum(deg, 1.0)).reshape(n, 1)   # isolated -> mean 0
    inv_p = _pad2(inv_deg, n_pad, 1)

    x_p = _pad2(x, n_pad, h_pad).astype(jnp.bfloat16)
    # Stacked [Wl; Wr] -> single K=2*Hp finalize matmul.
    w1_p = jnp.concatenate(
        [_pad2(wl1, h_pad, h_pad), _pad2(wr1, h_pad, h_pad)], axis=0
    ).astype(jnp.bfloat16)
    w2_p = jnp.concatenate(
        [_pad2(wl2, h_pad, h_pad), _pad2(wr2, h_pad, h_pad)], axis=0
    ).astype(jnp.bfloat16)
    b1_p = _pad2(b1, 1, h_pad)
    b2_p = _pad2(b2, 1, h_pad)

    if fused:
        out = pl.pallas_call(
            _gnn_fused_kernel,
            out_shape=jax.ShapeDtypeStruct((n_pad, h_pad), jnp.float32),
            compiler_params=pltpu.CompilerParams(
                vmem_limit_bytes=_vmem_limit(
                    _fused_vmem_bytes(n_pad, h_pad), limit_cap)),
        )(a_p, inv_p, x_p, w1_p, b1_p, w2_p, b2_p)
        return out[:n, :h]

    # --- tiled path: one pallas_call per layer (agg2 needs all rows of h) ----
    grid = (n_pad // tm, n_pad // tk)
    vmem = _vmem_limit(_tiled_vmem_bytes(tm, tk, n_pad, h_pad, x_resident),
                       limit_cap)

    def sage_layer(xin, w, b, *, relu, out_dtype):
        if x_resident:
            kern = functools.partial(_sage_layer_xres_kernel,
                                     relu=relu, tm=tm, tk=tk)
            in_specs = [
                pl.BlockSpec((tm, tk), lambda i, k: (i, k)),          # A tile
                pl.BlockSpec((n_pad, h_pad), lambda i, k: (0, 0)),    # x resident
                pl.BlockSpec((n_pad, 1), lambda i, k: (0, 0)),        # 1/deg resident
                pl.BlockSpec((2 * h_pad, h_pad), lambda i, k: (0, 0)),# [Wl;Wr]
                pl.BlockSpec((1, h_pad), lambda i, k: (0, 0)),        # bias
            ]
            args = (a_p, xin, inv_p, w, b)
        else:
            kern = functools.partial(_sage_layer_stream_kernel, relu=relu)
            in_specs = [
                pl.BlockSpec((tm, tk), lambda i, k: (i, k)),          # A tile
                pl.BlockSpec((tk, h_pad), lambda i, k: (k, 0)),       # x (neighbors)
                pl.BlockSpec((tm, h_pad), lambda i, k: (i, 0)),       # x (root)
                pl.BlockSpec((tm, 1), lambda i, k: (i, 0)),           # 1/deg
                pl.BlockSpec((2 * h_pad, h_pad), lambda i, k: (0, 0)),# [Wl;Wr]
                pl.BlockSpec((1, h_pad), lambda i, k: (0, 0)),        # bias
            ]
            args = (a_p, xin, xin, inv_p, w, b)

        return pl.pallas_call(
            kern,
            out_shape=jax.ShapeDtypeStruct((n_pad, h_pad), out_dtype),
            grid_spec=pltpu.PrefetchScalarGridSpec(
                num_scalar_prefetch=0,
                grid=grid,
                in_specs=in_specs,
                out_specs=pl.BlockSpec((tm, h_pad), lambda i, k: (i, 0)),
                scratch_shapes=[pltpu.VMEM((tm, h_pad), jnp.float32)],
            ),
            compiler_params=pltpu.CompilerParams(
                dimension_semantics=("parallel", "arbitrary"),
                vmem_limit_bytes=vmem),
        )(*args)

    h1 = sage_layer(x_p, w1_p, b1_p, relu=True, out_dtype=jnp.bfloat16)
    out = sage_layer(h1, w2_p, b2_p, relu=False, out_dtype=jnp.float32)
    return out[:n, :h]


# ----------------------------------------------------------------------------
# Params + pure-JAX references
# ----------------------------------------------------------------------------
def init_params(key, hidden):
    ks = jax.random.split(key, 6)
    scale = 1.0 / jnp.sqrt(hidden)
    # weights stored as (in, out) == PyTorch Linear weight.T
    wl1 = jax.random.uniform(ks[0], (hidden, hidden), jnp.float32, -scale, scale)
    wr1 = jax.random.uniform(ks[1], (hidden, hidden), jnp.float32, -scale, scale)
    b1 = jax.random.uniform(ks[2], (1, hidden), jnp.float32, -scale, scale)
    wl2 = jax.random.uniform(ks[3], (hidden, hidden), jnp.float32, -scale, scale)
    wr2 = jax.random.uniform(ks[4], (hidden, hidden), jnp.float32, -scale, scale)
    b2 = jax.random.uniform(ks[5], (1, hidden), jnp.float32, -scale, scale)
    return (wl1, wr1, b1, wl2, wr2, b2)


def reference_forward(x, edge_index, params, emulate_bf16=False):
    """Pure-JAX reference.  With emulate_bf16=True it mirrors the kernel numerics
    (bf16 operands, f32 accumulation, exact f32 mean factor)."""
    n = x.shape[0]
    src, dst = edge_index[0], edge_index[1]
    counts = jnp.zeros((n, n), jnp.float32).at[dst, src].add(1.0)
    deg = jnp.sum(counts, axis=1, keepdims=True)
    inv = 1.0 / jnp.maximum(deg, 1.0)
    wl1, wr1, b1, wl2, wr2, b2 = params

    if emulate_bf16:
        cast = lambda t: t.astype(jnp.bfloat16)
        counts, xx = cast(counts), cast(x)
        wl1, wr1, wl2, wr2 = map(cast, (wl1, wr1, wl2, wr2))
    else:
        xx = x

    dot = lambda a, b: jnp.dot(a, b, preferred_element_type=jnp.float32)

    agg1 = dot(counts, xx) * inv
    if emulate_bf16:
        agg1 = agg1.astype(jnp.bfloat16)
    h = jnp.maximum(dot(agg1, wl1) + dot(xx, wr1) + b1, 0.0)
    if emulate_bf16:
        h = h.astype(jnp.bfloat16)
    agg2 = dot(counts, h) * inv
    if emulate_bf16:
        agg2 = agg2.astype(jnp.bfloat16)
    return dot(agg2, wl2) + dot(h, wr2) + b2


# ----------------------------------------------------------------------------
if __name__ == "__main__":
    key = jax.random.PRNGKey(0)
    k_x, k_p, k_e, k_x2, k_e2, k_x3, k_e3 = jax.random.split(key, 7)

    num_nodes, hidden, num_edges = 16, 32, 48
    x = jax.random.normal(k_x, (num_nodes, hidden), jnp.float32)
    edge_index = jax.random.randint(k_e, (2, num_edges), 0, num_nodes,
                                    dtype=jnp.int32)
    params = init_params(k_p, hidden)

    # --- small graph: fused single-call path ---
    out = jax.block_until_ready(gnn_forward(x, edge_index, params))
    assert out.shape == (num_nodes, hidden)
    ref_emu = reference_forward(x, edge_index, params, emulate_bf16=True)
    assert jnp.allclose(out, ref_emu, atol=1e-2, rtol=1e-2), \
        "fused kernel mismatch vs bf16-emulated reference"
    ref_f32 = reference_forward(x, edge_index, params, emulate_bf16=False)
    assert jnp.allclose(out, ref_f32, atol=1e-1, rtol=5e-2), \
        "fused kernel mismatch vs f32 reference"

    # --- medium graph: row-tiled path, single tile, resident x ---
    n2, e2 = 300, 1500
    x2 = jax.random.normal(k_x2, (n2, hidden), jnp.float32)
    edge_index2 = jax.random.randint(k_e2, (2, e2), 0, n2, dtype=jnp.int32)
    out2 = jax.block_until_ready(
        gnn_forward(x2, edge_index2, params, force_tiled=True))
    assert out2.shape == (n2, hidden)
    ref2_emu = reference_forward(x2, edge_index2, params, emulate_bf16=True)
    assert jnp.allclose(out2, ref2_emu, atol=1e-2, rtol=1e-2), \
        "tiled kernel mismatch vs bf16-emulated reference"

    # --- larger graph: exercise the multi-block reduction grid + megacore axis ---
    n3, e3 = 700, 4000
    x3 = jax.random.normal(k_x3, (n3, hidden), jnp.float32)
    edge_index3 = jax.random.randint(k_e3, (2, e3), 0, n3, dtype=jnp.int32)
    out3 = jax.block_until_ready(
        gnn_forward(x3, edge_index3, params, force_tiled=True))
    assert out3.shape == (n3, hidden)
    ref3_emu = reference_forward(x3, edge_index3, params, emulate_bf16=True)
    assert jnp.allclose(out3, ref3_emu, atol=2e-2, rtol=2e-2), \
        "tiled multi-block kernel mismatch vs bf16-emulated reference"

    print("KERNEL_OK")
</pallas_src>

<mosaic_0001>
module attributes {stable_mosaic.version = 11 : i64} {
  func.func @_gnn_fused_kernel(%arg0: memref<128x128xbf16, #tpu.memory_space<vmem>>, %arg1: memref<128x1xf32, #tpu.memory_space<vmem>>, %arg2: memref<128x128xbf16, #tpu.memory_space<vmem>>, %arg3: memref<256x128xbf16, #tpu.memory_space<vmem>>, %arg4: memref<1x128xf32, #tpu.memory_space<vmem>>, %arg5: memref<256x128xbf16, #tpu.memory_space<vmem>>, %arg6: memref<1x128xf32, #tpu.memory_space<vmem>>, %arg7: memref<128x128xf32, #tpu.memory_space<vmem>>) attributes {dimension_semantics = [], scalar_prefetch = 0 : i64, scratch_operands = 0 : i64, tpu.core_type = #tpu.core_type<tc>} {
    %c0 = arith.constant 0 : index
    %c0_0 = arith.constant 0 : index
    %0 = vector.load %arg0[%c0, %c0_0] : memref<128x128xbf16, #tpu.memory_space<vmem>>, vector<128x128xbf16>
    %c0_1 = arith.constant 0 : index
    %c0_2 = arith.constant 0 : index
    %1 = vector.load %arg2[%c0_1, %c0_2] : memref<128x128xbf16, #tpu.memory_space<vmem>>, vector<128x128xbf16>
    %c0_3 = arith.constant 0 : index
    %c0_4 = arith.constant 0 : index
    %2 = vector.load %arg1[%c0_3, %c0_4] : memref<128x1xf32, #tpu.memory_space<vmem>>, vector<128x1xf32>
    %cst = arith.constant dense<0.000000e+00> : vector<128x128xf32>
    %3 = tpu.matmul %0, %1, %cst {dimension_numbers = #tpu.dot_dimension_numbers<[1], [0], [0], [1], [0, 0, 1, 1], [], []>} : vector<128x128xbf16>, vector<128x128xbf16>, vector<128x128xf32> -> vector<128x128xf32>
    %4 = vector.broadcast %2 : vector<128x1xf32> to vector<128x128xf32>
    %5 = arith.mulf %3, %4 : vector<128x128xf32>
    %6 = arith.truncf %5 : vector<128x128xf32> to vector<128x128xbf16>
    %7 = tpu.concatenate %6, %1 in 1 : vector<128x128xbf16>, vector<128x128xbf16> -> vector<128x256xbf16>
    %c0_5 = arith.constant 0 : index
    %c0_6 = arith.constant 0 : index
    %8 = vector.load %arg3[%c0_5, %c0_6] : memref<256x128xbf16, #tpu.memory_space<vmem>>, vector<256x128xbf16>
    %cst_7 = arith.constant dense<0.000000e+00> : vector<128x128xf32>
    %9 = tpu.matmul %7, %8, %cst_7 {dimension_numbers = #tpu.dot_dimension_numbers<[1], [0], [0], [1], [0, 0, 1, 1], [], []>} : vector<128x256xbf16>, vector<256x128xbf16>, vector<128x128xf32> -> vector<128x128xf32>
    %c0_8 = arith.constant 0 : index
    %c0_9 = arith.constant 0 : index
    %10 = vector.load %arg4[%c0_8, %c0_9] : memref<1x128xf32, #tpu.memory_space<vmem>>, vector<1x128xf32>
    %11 = vector.broadcast %10 : vector<1x128xf32> to vector<128x128xf32>
    %12 = arith.addf %9, %11 : vector<128x128xf32>
    %cst_10 = arith.constant 0.000000e+00 : f32
    %13 = vector.broadcast %cst_10 : f32 to vector<128x128xf32>
    %14 = arith.maximumf %12, %13 : vector<128x128xf32>
    %15 = arith.truncf %14 : vector<128x128xf32> to vector<128x128xbf16>
    %cst_11 = arith.constant dense<0.000000e+00> : vector<128x128xf32>
    %16 = tpu.matmul %0, %15, %cst_11 {dimension_numbers = #tpu.dot_dimension_numbers<[1], [0], [0], [1], [0, 0, 1, 1], [], []>} : vector<128x128xbf16>, vector<128x128xbf16>, vector<128x128xf32> -> vector<128x128xf32>
    %17 = vector.broadcast %2 : vector<128x1xf32> to vector<128x128xf32>
    %18 = arith.mulf %16, %17 : vector<128x128xf32>
    %19 = arith.truncf %18 : vector<128x128xf32> to vector<128x128xbf16>
    %20 = tpu.concatenate %19, %15 in 1 : vector<128x128xbf16>, vector<128x128xbf16> -> vector<128x256xbf16>
    %c0_12 = arith.constant 0 : index
    %c0_13 = arith.constant 0 : index
    %21 = vector.load %arg5[%c0_12, %c0_13] : memref<256x128xbf16, #tpu.memory_space<vmem>>, vector<256x128xbf16>
    %cst_14 = arith.constant dense<0.000000e+00> : vector<128x128xf32>
    %22 = tpu.matmul %20, %21, %cst_14 {dimension_numbers = #tpu.dot_dimension_numbers<[1], [0], [0], [1], [0, 0, 1, 1], [], []>} : vector<128x256xbf16>, vector<256x128xbf16>, vector<128x128xf32> -> vector<128x128xf32>
    %c0_15 = arith.constant 0 : index
    %c0_16 = arith.constant 0 : index
    %23 = vector.load %arg6[%c0_15, %c0_16] : memref<1x128xf32, #tpu.memory_space<vmem>>, vector<1x128xf32>
    %24 = vector.broadcast %23 : vector<1x128xf32> to vector<128x128xf32>
    %25 = arith.addf %22, %24 : vector<128x128xf32>
    %c0_17 = arith.constant 0 : index
    %c0_18 = arith.constant 0 : index
    %26 = vector.load %arg7[%c0_17, %c0_18] : memref<128x128xf32, #tpu.memory_space<vmem>>, vector<128x128xf32>
    tpu.vector_store %arg7[%c0_17, %c0_18], %25 {strides = array<i32>} : memref<128x128xf32, #tpu.memory_space<vmem>>, vector<128x128xf32>,
    return
  }
}

</mosaic_0001>

<llo_original>
// kernel: tpu_custom_call.1
$region0: #{tpu_custom_call.1}
  #allocation0 [shape = 'u32[]', space=smem, size = 0x4, offset = 0x4, fixed_abs, tag = 'smem constant byte address 0x4 - core index']
  #allocation1 [shape = 'u32[144,128]{1,0:T(1,128)}', space=vmem, size = 0x12000, scoped, tag = 'internal scratch']
  %s0 = inlined_call_operand.hbm [shape: bf16[128,128], index: 0, kind: input, shape index: {}]
  %s1 = inlined_call_operand.vmem [shape: f32[128,1], index: 1, kind: input, shape index: {}]
  %s2 = inlined_call_operand.hbm [shape: bf16[128,128], index: 2, kind: input, shape index: {}]
  %s3 = inlined_call_operand.vmem [shape: bf16[256,128], index: 3, kind: input, shape index: {}]
  %s4 = inlined_call_operand.vmem [shape: f32[1,128], index: 4, kind: input, shape index: {}]
  %s5 = inlined_call_operand.hbm [shape: bf16[256,128], index: 5, kind: input, shape index: {}]
  %s6 = inlined_call_operand.vmem [shape: f32[1,128], index: 6, kind: input, shape index: {}]
  %s7 = inlined_call_operand.hbm [shape: f32[128,128], index: 7, kind: output, shape index: {}]
  %s8 = sld [smem:[#allocation0]]
  $region50: #{tpu_custom_call.1} parent=0
    _
  %s10 = ssub.s32 1, %s8
  %s11 = scalar_select 0, %s10, %s8
  $region1: #{tpu_custom_call.1} parent=0
    #allocation2 [shape = 'u8[32768]{0}', space=vmem, size = 0x8000, scoped, tag = 'input window, operand 0, single buffered']
    #allocation3 [shape = 's32[1]{0}', space=sflag, size = 0x4, scoped, tag = 'scoped memory for tpu_custom_call.1']
    #allocation4 [shape = 's32[1]{0}', space=sflag, size = 0x4, scoped, tag = 'scoped memory for tpu_custom_call.1']
    #allocation5 [shape = 'u8[32768]{0}', space=vmem, size = 0x8000, scoped, tag = 'input window, operand 2, single buffered']
    #allocation6 [shape = 's32[1]{0}', space=sflag, size = 0x4, scoped, tag = 'scoped memory for tpu_custom_call.1']
    #allocation7 [shape = 'u8[65536]{0}', space=vmem, size = 0x10000, scoped, tag = 'input window, operand 5, single buffered']
    #allocation8 [shape = 'u8[65536]{0}', space=vmem, size = 0x10000, scoped, tag = 'output window, operand 0, single buffered']
    %12 = vsyncpa [#allocation3], 0
    %13 = vsyncpa [#allocation6], 0
    %14 = vsyncpa [#allocation4], 0
    // Predicated region
    $region2: #{tpu_custom_call.1} parent=1 // pred_check
      _
    $region3: #{tpu_custom_call.1} parent=1 // pred_check_branch
      %16 = sbr.rel (0) target = $region5
    $region4: #{tpu_custom_call.1} parent=1 // pred_region
      %s18 = ssub.s32 1024, 1024
      %19 = vsyncadd [#allocation3], %s18
      %s20 = sshll.u32 [#allocation2], 4
      %s21 = int_to_ptr.vmem [resolvable:$true] %s20
      %26 = dma.hbm_to_vmem [thread:$0]  %s0, 1024, %s21, [#allocation3], 64, 64, 4
    $region5: #{tpu_custom_call.1} parent=1 // pred_fallthru
      _
    // Predicated region
    $region6: #{tpu_custom_call.1} parent=1 // pred_check
      _
    $region7: #{tpu_custom_call.1} parent=1 // pred_check_branch
      %28 = sbr.rel (0) target = $region9
    $region8: #{tpu_custom_call.1} parent=1 // pred_region
      _
    $region9: #{tpu_custom_call.1} parent=1 // pred_fallthru
      _
    // Predicated region
    $region10: #{tpu_custom_call.1} parent=1 // pred_check
      _
    $region11: #{tpu_custom_call.1} parent=1 // pred_check_branch
      %30 = sbr.rel (0) target = $region13
    $region12: #{tpu_custom_call.1} parent=1 // pred_region
      %s32 = ssub.s32 1024, 1024
      %33 = vsyncadd [#allocation6], %s32
      %s34 = sshll.u32 [#allocation5], 4
      %s35 = int_to_ptr.vmem [resolvable:$true] %s34
      %40 = dma.hbm_to_vmem [thread:$0]  %s2, 1024, %s35, [#allocation6], 64, 64, 4
    $region13: #{tpu_custom_call.1} parent=1 // pred_fallthru
      _
    // Predicated region
    $region14: #{tpu_custom_call.1} parent=1 // pred_check
      _
    $region15: #{tpu_custom_call.1} parent=1 // pred_check_branch
      %42 = sbr.rel (0) target = $region17
    $region16: #{tpu_custom_call.1} parent=1 // pred_region
      _
    $region17: #{tpu_custom_call.1} parent=1 // pred_fallthru
      _
    // Predicated region
    $region18: #{tpu_custom_call.1} parent=1 // pred_check
      _
    $region19: #{tpu_custom_call.1} parent=1 // pred_check_branch
      %44 = sbr.rel (0) target = $region21
    $region20: #{tpu_custom_call.1} parent=1 // pred_region
      _
    $region21: #{tpu_custom_call.1} parent=1 // pred_fallthru
      _
    // Predicated region
    $region22: #{tpu_custom_call.1} parent=1 // pred_check
      _
    $region23: #{tpu_custom_call.1} parent=1 // pred_check_branch
      %46 = sbr.rel (0) target = $region25
    $region24: #{tpu_custom_call.1} parent=1 // pred_region
      %s48 = ssub.s32 2048, 2048
      %49 = vsyncadd [#allocation6], %s48
      %s50 = sshll.u32 [#allocation7], 4
      %s51 = int_to_ptr.vmem [resolvable:$true] %s50
      %56 = dma.hbm_to_vmem [thread:$0]  %s5, 2048, %s51, [#allocation6], 64, 64, 4
    $region25: #{tpu_custom_call.1} parent=1 // pred_fallthru
      _
    // Predicated region
    $region26: #{tpu_custom_call.1} parent=1 // pred_check
      _
    $region27: #{tpu_custom_call.1} parent=1 // pred_check_branch
      %58 = sbr.rel (0) target = $region29
    $region28: #{tpu_custom_call.1} parent=1 // pred_region
      _
    $region29: #{tpu_custom_call.1} parent=1 // pred_fallthru
      _
    // Predicated region
    $region30: #{tpu_custom_call.1} parent=1 // pred_check
      _
    $region31: #{tpu_custom_call.1} parent=1 // pred_check_branch
      %60 = sbr.rel (0) target = $region33
    $region32: #{tpu_custom_call.1} parent=1 // pred_region
      %61 = dma.done [#allocation3], 1024
    $region33: #{tpu_custom_call.1} parent=1 // pred_fallthru
      _
    // Predicated region
    $region34: #{tpu_custom_call.1} parent=1 // pred_check
      _
    $region35: #{tpu_custom_call.1} parent=1 // pred_check_branch
      %63 = sbr.rel (0) target = $region37
    $region36: #{tpu_custom_call.1} parent=1 // pred_region
      %64 = dma.done [#allocation6], 1024
    $region37: #{tpu_custom_call.1} parent=1 // pred_fallthru
      _
    // Predicated region
    $region38: #{tpu_custom_call.1} parent=1 // pred_check
      _
    $region39: #{tpu_custom_call.1} parent=1 // pred_check_branch
      %66 = sbr.rel (0) target = $region41
    $region40: #{tpu_custom_call.1} parent=1 // pred_region
      %67 = dma.done [#allocation6], 2048
    $region41: #{tpu_custom_call.1} parent=1 // pred_fallthru
      _
    %v69 = vld [vmem:[#allocation2] sm:$0xf]
    %v70 = vld [vmem:[#allocation2 + $0x4] sm:$0xf]
    %v71 = vld [vmem:[#allocation2 + $0x8] sm:$0xf]
    %v72 = vld [vmem:[#allocation2 + $0xc] sm:$0xf]
    %v73 = vld [vmem:[#allocation2 + $0x10] sm:$0xf]
    %v74 = vld [vmem:[#allocation2 + $0x14] sm:$0xf]
    %v75 = vld [vmem:[#allocation2 + $0x18] sm:$0xf]
    %v76 = vld [vmem:[#allocation2 + $0x1c] sm:$0xf]
    %v77 = vld [vmem:[#allocation2 + $0x20] sm:$0xf]
    %v78 = vld [vmem:[#allocation2 + $0x24] sm:$0xf]
    %v79 = vld [vmem:[#allocation2 + $0x28] sm:$0xf]
    %v80 = vld [vmem:[#allocation2 + $0x2c] sm:$0xf]
    %v81 = vld [vmem:[#allocation2 + $0x30] sm:$0xf]
    %v82 = vld [vmem:[#allocation2 + $0x34] sm:$0xf]
    %v83 = vld [vmem:[#allocation2 + $0x38] sm:$0xf]
    %v84 = vld [vmem:[#allocation2 + $0x3c] sm:$0xf]
    %v85 = vld [vmem:[#allocation5] sm:$0xf]
    %v86 = vld [vmem:[#allocation5 + $0x4] sm:$0xf]
    %v87 = vld [vmem:[#allocation5 + $0x8] sm:$0xf]
    %v88 = vld [vmem:[#allocation5 + $0xc] sm:$0xf]
    %v89 = vld [vmem:[#allocation5 + $0x10] sm:$0xf]
    %v90 = vld [vmem:[#allocation5 + $0x14] sm:$0xf]
    %v91 = vld [vmem:[#allocation5 + $0x18] sm:$0xf]
    %v92 = vld [vmem:[#allocation5 + $0x1c] sm:$0xf]
    %v93 = vld [vmem:[#allocation5 + $0x20] sm:$0xf]
    %v94 = vld [vmem:[#allocation5 + $0x24] sm:$0xf]
    %v95 = vld [vmem:[#allocation5 + $0x28] sm:$0xf]
    %v96 = vld [vmem:[#allocation5 + $0x2c] sm:$0xf]
    %v97 = vld [vmem:[#allocation5 + $0x30] sm:$0xf]
    %v98 = vld [vmem:[#allocation5 + $0x34] sm:$0xf]
    %v99 = vld [vmem:[#allocation5 + $0x38] sm:$0xf]
    %v100 = vld [vmem:[#allocation5 + $0x3c] sm:$0xf]
    %v101 = vld [vmem:[%s1] sm:$0xff]
    %v102 = vld [vmem:[%s1 + $0x8] sm:$0xff]
    %v103 = vld [vmem:[%s1 + $0x10] sm:$0xff]
    %v104 = vld [vmem:[%s1 + $0x18] sm:$0xff]
    %v105 = vld [vmem:[%s1 + $0x20] sm:$0xff]
    %v106 = vld [vmem:[%s1 + $0x28] sm:$0xff]
    %v107 = vld [vmem:[%s1 + $0x30] sm:$0xff]
    %v108 = vld [vmem:[%s1 + $0x38] sm:$0xff]
    %v109 = vld [vmem:[%s1 + $0x40] sm:$0xff]
    %v110 = vld [vmem:[%s1 + $0x48] sm:$0xff]
    %v111 = vld [vmem:[%s1 + $0x50] sm:$0xff]
    %v112 = vld [vmem:[%s1 + $0x58] sm:$0xff]
    %v113 = vld [vmem:[%s1 + $0x60] sm:$0xff]
    %v114 = vld [vmem:[%s1 + $0x68] sm:$0xff]
    %v115 = vld [vmem:[%s1 + $0x70] sm:$0xff]
    %v116 = vld [vmem:[%s1 + $0x78] sm:$0xff]
    %v133 = vunpack.c.l.b16 %v69
    %v134 = vunpack.c.l.b16 %v70
    %v135 = vunpack.c.l.b16 %v71
    %v136 = vunpack.c.l.b16 %v72
    %v137 = vunpack.c.l.b16 %v73
    %v138 = vunpack.c.l.b16 %v74
    %v139 = vunpack.c.l.b16 %v75
    %v140 = vunpack.c.l.b16 %v76
    %v141 = vunpack.c.l.b16 %v77
    %v142 = vunpack.c.l.b16 %v78
    %v143 = vunpack.c.l.b16 %v79
    %v144 = vunpack.c.l.b16 %v80
    %v145 = vunpack.c.l.b16 %v81
    %v146 = vunpack.c.l.b16 %v82
    %v147 = vunpack.c.l.b16 %v83
    %v148 = vunpack.c.l.b16 %v84
    %v149 = vpack.c.b16 %v134, %v133
    %v150 = vpack.c.b16 %v136, %v135
    %v151 = vpack.c.b16 %v138, %v137
    %v152 = vpack.c.b16 %v140, %v139
    %v153 = vpack.c.b16 %v142, %v141
    %v154 = vpack.c.b16 %v144, %v143
    %v155 = vpack.c.b16 %v146, %v145
    %v156 = vpack.c.b16 %v148, %v147
    %v181 = vunpack.c.l.b16 %v85
    %v182 = vunpack.c.l.b16 %v86
    %v183 = vunpack.c.l.b16 %v87
    %v184 = vunpack.c.l.b16 %v88
    %v185 = vunpack.c.l.b16 %v89
    %v186 = vunpack.c.l.b16 %v90
    %v187 = vunpack.c.l.b16 %v91
    %v188 = vunpack.c.l.b16 %v92
    %v189 = vunpack.c.l.b16 %v93
    %v190 = vunpack.c.l.b16 %v94
    %v191 = vunpack.c.l.b16 %v95
    %v192 = vunpack.c.l.b16 %v96
    %v193 = vunpack.c.l.b16 %v97
    %v194 = vunpack.c.l.b16 %v98
    %v195 = vunpack.c.l.b16 %v99
    %v196 = vunpack.c.l.b16 %v100
    %v197 = vpack.c.b16 %v182, %v181
    %v198 = vpack.c.b16 %v184, %v183
    %v199 = vpack.c.b16 %v186, %v185
    %v200 = vpack.c.b16 %v188, %v187
    %v201 = vpack.c.b16 %v190, %v189
    %v202 = vpack.c.b16 %v192, %v191
    %v203 = vpack.c.b16 %v194, %v193
    %v204 = vpack.c.b16 %v196, %v195
    %213 = vmatprep.subr.bf16.mxu0 0
    %214 = vmatpush1.bf16.msra.mxu0 %v197
    %215 = vmatprep.subr.bf16.mxu0 0
    %216 = vmatpush1.bf16.msra.mxu0 %v198
    %217 = vmatprep.subr.bf16.mxu0 0
    %218 = vmatpush1.bf16.msra.mxu0 %v199
    %219 = vmatprep.subr.bf16.mxu0 0
    %220 = vmatpush1.bf16.msra.mxu0 %v200
    %221 = vmatprep.subr.bf16.mxu0 0
    %222 = vmatpush1.bf16.msra.mxu0 %v201
    %223 = vmatprep.subr.bf16.mxu0 0
    %224 = vmatpush1.bf16.msra.mxu0 %v202
    %225 = vmatprep.subr.bf16.mxu0 0
    %226 = vmatpush1.bf16.msra.mxu0 %v203
    %227 = vmatprep.subr.bf16.mxu0 0
    %228 = vmatpush1.bf16.msra.mxu0 %v204
    %229 = vmatprep.subr.bf16.mxu0 0
    %230 = vmatpush1.bf16.msra.mxu0 0
    %231 = vmatprep.subr.bf16.mxu0 0
    %232 = vmatpush1.bf16.msra.mxu0 0
    %233 = vmatprep.subr.bf16.mxu0 0
    %234 = vmatpush1.bf16.msra.mxu0 0
    %235 = vmatprep.subr.bf16.mxu0 0
    %236 = vmatpush1.bf16.msra.mxu0 0
    %237 = vmatprep.subr.bf16.mxu0 0
    %238 = vmatpush1.bf16.msra.mxu0 0
    %239 = vmatprep.subr.bf16.mxu0 0
    %240 = vmatpush1.bf16.msra.mxu0 0
    %241 = vmatprep.subr.bf16.mxu0 0
    %242 = vmatpush1.bf16.msra.mxu0 0
    %243 = vmatprep.subr.bf16.mxu0 0
    %244 = vmatpush1.bf16.msra.mxu0 0
    %245 = vmatprep.mubr.bf16.mxu0 0
    %246 = vmatmul.mubr.bf16.gmra.mrb[0].mxu0 %v149
    %v247 = vpop.f32.mrb[0].mxu0
    %v248 = vadd.f32 0.0, %v247
    %v249 = vpop.f32.mrb[0].mxu0
    %v250 = vpop.f32.mrb[0].mxu0
    %v251 = vadd.f32 0.0, %v250
    %v252 = vpop.f32.mrb[0].mxu0
    %253 = vmatprep.mubr.bf16.mxu0 0
    %254 = vmatmul.mubr.bf16.gmra.mrb[0].mxu0 %v150
    %v255 = vpop.f32.mrb[0].mxu0
    %v256 = vadd.f32 0.0, %v255
    %v257 = vpop.f32.mrb[0].mxu0
    %v258 = vpop.f32.mrb[0].mxu0
    %v259 = vadd.f32 0.0, %v258
    %v260 = vpop.f32.mrb[0].mxu0
    %261 = vmatprep.mubr.bf16.mxu0 0
    %262 = vmatmul.mubr.bf16.gmra.mrb[0].mxu0 %v151
    %v263 = vpop.f32.mrb[0].mxu0
    %v264 = vadd.f32 0.0, %v263
    %v265 = vpop.f32.mrb[0].mxu0
    %v266 = vpop.f32.mrb[0].mxu0
    %v267 = vadd.f32 0.0, %v266
    %v268 = vpop.f32.mrb[0].mxu0
    %269 = vmatprep.mubr.bf16.mxu0 0
    %270 = vmatmul.mubr.bf16.gmra.mrb[0].mxu0 %v152
    %v271 = vpop.f32.mrb[0].mxu0
    %v272 = vadd.f32 0.0, %v271
    %v273 = vpop.f32.mrb[0].mxu0
    %v274 = vpop.f32.mrb[0].mxu0
    %v275 = vadd.f32 0.0, %v274
    %v276 = vpop.f32.mrb[0].mxu0
    %277 = vmatprep.mubr.bf16.mxu0 0
    %278 = vmatmul.mubr.bf16.gmra.mrb[0].mxu0 %v153
    %v279 = vpop.f32.mrb[0].mxu0
    %v280 = vadd.f32 0.0, %v279
    %v281 = vpop.f32.mrb[0].mxu0
    %v282 = vpop.f32.mrb[0].mxu0
    %v283 = vadd.f32 0.0, %v282
    %v284 = vpop.f32.mrb[0].mxu0
    %285 = vmatprep.mubr.bf16.mxu0 0
    %286 = vmatmul.mubr.bf16.gmra.mrb[0].mxu0 %v154
    %v287 = vpop.f32.mrb[0].mxu0
    %v288 = vadd.f32 0.0, %v287
    %v289 = vpop.f32.mrb[0].mxu0
    %v290 = vpop.f32.mrb[0].mxu0
    %v291 = vadd.f32 0.0, %v290
    %v292 = vpop.f32.mrb[0].mxu0
    %293 = vmatprep.mubr.bf16.mxu0 0
    %294 = vmatmul.mubr.bf16.gmra.mrb[0].mxu0 %v155
    %v295 = vpop.f32.mrb[0].mxu0
    %v296 = vadd.f32 0.0, %v295
    %v297 = vpop.f32.mrb[0].mxu0
    %v298 = vpop.f32.mrb[0].mxu0
    %v299 = vadd.f32 0.0, %v298
    %v300 = vpop.f32.mrb[0].mxu0
    %301 = vmatprep.mubr.bf16.mxu0 0
    %302 = vmatmul.mubr.bf16.gmra.mrb[0].mxu0 %v156
    %v303 = vpop.f32.mrb[0].mxu0
    %v304 = vadd.f32 0.0, %v303
    %v305 = vpop.f32.mrb[0].mxu0
    %v306 = vpop.f32.mrb[0].mxu0
    %v307 = vadd.f32 0.0, %v306
    %v308 = vpop.f32.mrb[0].mxu0
    %309 = vdwg.mxu0
    %311 = vset.pattern.permute.xlu0 0
    %312 = vperm.xlu0 %311, %v101
    %v313 = vpop.permute.xlu0 %312
    %316 = vset.pattern.permute.xlu0 0
    %317 = vperm.xlu0 %316, %v102
    %v318 = vpop.permute.xlu0 %317
    %321 = vset.pattern.permute.xlu0 0
    %322 = vperm.xlu0 %321, %v103
    %v323 = vpop.permute.xlu0 %322
    %326 = vset.pattern.permute.xlu0 0
    %327 = vperm.xlu0 %326, %v104
    %v328 = vpop.permute.xlu0 %327
    %331 = vset.pattern.permute.xlu0 0
    %332 = vperm.xlu0 %331, %v105
    %v333 = vpop.permute.xlu0 %332
    %336 = vset.pattern.permute.xlu0 0
    %337 = vperm.xlu0 %336, %v106
    %v338 = vpop.permute.xlu0 %337
    %341 = vset.pattern.permute.xlu0 0
    %342 = vperm.xlu0 %341, %v107
    %v343 = vpop.permute.xlu0 %342
    %346 = vset.pattern.permute.xlu0 0
    %347 = vperm.xlu0 %346, %v108
    %v348 = vpop.permute.xlu0 %347
    %351 = vset.pattern.permute.xlu0 0
    %352 = vperm.xlu0 %351, %v109
    %v353 = vpop.permute.xlu0 %352
    %356 = vset.pattern.permute.xlu0 0
    %357 = vperm.xlu0 %356, %v110
    %v358 = vpop.permute.xlu0 %357
    %361 = vset.pattern.permute.xlu0 0
    %362 = vperm.xlu0 %361, %v111
    %v363 = vpop.permute.xlu0 %362
    %366 = vset.pattern.permute.xlu0 0
    %367 = vperm.xlu0 %366, %v112
    %v368 = vpop.permute.xlu0 %367
    %371 = vset.pattern.permute.xlu0 0
    %372 = vperm.xlu0 %371, %v113
    %v373 = vpop.permute.xlu0 %372
    %376 = vset.pattern.permute.xlu0 0
    %377 = vperm.xlu0 %376, %v114
    %v378 = vpop.permute.xlu0 %377
    %381 = vset.pattern.permute.xlu0 0
    %382 = vperm.xlu0 %381, %v115
    %v383 = vpop.permute.xlu0 %382
    %386 = vset.pattern.permute.xlu0 0
    %387 = vperm.xlu0 %386, %v116
    %v388 = vpop.permute.xlu0 %387
    %v390 = vmul.f32 %v248, %v313
    %v391 = vmul.f32 %v251, %v318
    %v392 = vmul.f32 %v256, %v323
    %v393 = vmul.f32 %v259, %v328
    %v394 = vmul.f32 %v264, %v333
    %v395 = vmul.f32 %v267, %v338
    %v396 = vmul.f32 %v272, %v343
    %v397 = vmul.f32 %v275, %v348
    %v398 = vmul.f32 %v280, %v353
    %v399 = vmul.f32 %v283, %v358
    %v400 = vmul.f32 %v288, %v363
    %v401 = vmul.f32 %v291, %v368
    %v402 = vmul.f32 %v296, %v373
    %v403 = vmul.f32 %v299, %v378
    %v404 = vmul.f32 %v304, %v383
    %v405 = vmul.f32 %v307, %v388
    %v406 = vpack.c.bf16 %v391, %v390
    %v407 = vpack.c.bf16 %v393, %v392
    %v408 = vpack.c.bf16 %v395, %v394
    %v409 = vpack.c.bf16 %v397, %v396
    %v410 = vpack.c.bf16 %v399, %v398
    %v411 = vpack.c.bf16 %v401, %v400
    %v412 = vpack.c.bf16 %v403, %v402
    %v413 = vpack.c.bf16 %v405, %v404
    %v414 = vld [vmem:[%s3] sm:$0xf]
    %v415 = vld [vmem:[%s3 + $0x4] sm:$0xf]
    %v416 = vld [vmem:[%s3 + $0x8] sm:$0xf]
    %v417 = vld [vmem:[%s3 + $0xc] sm:$0xf]
    %v418 = vld [vmem:[%s3 + $0x10] sm:$0xf]
    %v419 = vld [vmem:[%s3 + $0x14] sm:$0xf]
    %v420 = vld [vmem:[%s3 + $0x18] sm:$0xf]
    %v421 = vld [vmem:[%s3 + $0x1c] sm:$0xf]
    %v422 = vld [vmem:[%s3 + $0x20] sm:$0xf]
    %v423 = vld [vmem:[%s3 + $0x24] sm:$0xf]
    %v424 = vld [vmem:[%s3 + $0x28] sm:$0xf]
    %v425 = vld [vmem:[%s3 + $0x2c] sm:$0xf]
    %v426 = vld [vmem:[%s3 + $0x30] sm:$0xf]
    %v427 = vld [vmem:[%s3 + $0x34] sm:$0xf]
    %v428 = vld [vmem:[%s3 + $0x38] sm:$0xf]
    %v429 = vld [vmem:[%s3 + $0x3c] sm:$0xf]
    %v430 = vld [vmem:[%s3 + $0x40] sm:$0xf]
    %v431 = vld [vmem:[%s3 + $0x44] sm:$0xf]
    %v432 = vld [vmem:[%s3 + $0x48] sm:$0xf]
    %v433 = vld [vmem:[%s3 + $0x4c] sm:$0xf]
    %v434 = vld [vmem:[%s3 + $0x50] sm:$0xf]
    %v435 = vld [vmem:[%s3 + $0x54] sm:$0xf]
    %v436 = vld [vmem:[%s3 + $0x58] sm:$0xf]
    %v437 = vld [vmem:[%s3 + $0x5c] sm:$0xf]
    %v438 = vld [vmem:[%s3 + $0x60] sm:$0xf]
    %v439 = vld [vmem:[%s3 + $0x64] sm:$0xf]
    %v440 = vld [vmem:[%s3 + $0x68] sm:$0xf]
    %v441 = vld [vmem:[%s3 + $0x6c] sm:$0xf]
    %v442 = vld [vmem:[%s3 + $0x70] sm:$0xf]
    %v443 = vld [vmem:[%s3 + $0x74] sm:$0xf]
    %v444 = vld [vmem:[%s3 + $0x78] sm:$0xf]
    %v445 = vld [vmem:[%s3 + $0x7c] sm:$0xf]
    %v446 = vld [vmem:[%s4] sm:$0x1]
    %v448 = vlaneseq
    %v449 = vshrl.u32 %v448, 7
    %v450 = vsub.s32 0, %v449
    %v451 = vrot.slane %v446, %v450
    %v485 = vunpack.c.l.b16 %v414
    %v486 = vunpack.c.l.b16 %v415
    %v487 = vunpack.c.l.b16 %v416
    %v488 = vunpack.c.l.b16 %v417
    %v489 = vunpack.c.l.b16 %v418
    %v490 = vunpack.c.l.b16 %v419
    %v491 = vunpack.c.l.b16 %v420
    %v492 = vunpack.c.l.b16 %v421
    %v493 = vunpack.c.l.b16 %v422
    %v494 = vunpack.c.l.b16 %v423
    %v495 = vunpack.c.l.b16 %v424
    %v496 = vunpack.c.l.b16 %v425
    %v497 = vunpack.c.l.b16 %v426
    %v498 = vunpack.c.l.b16 %v427
    %v499 = vunpack.c.l.b16 %v428
    %v500 = vunpack.c.l.b16 %v429
    %v501 = vunpack.c.l.b16 %v430
    %v502 = vunpack.c.l.b16 %v431
    %v503 = vunpack.c.l.b16 %v432
    %v504 = vunpack.c.l.b16 %v433
    %v505 = vunpack.c.l.b16 %v434
    %v506 = vunpack.c.l.b16 %v435
    %v507 = vunpack.c.l.b16 %v436
    %v508 = vunpack.c.l.b16 %v437
    %v509 = vunpack.c.l.b16 %v438
    %v510 = vunpack.c.l.b16 %v439
    %v511 = vunpack.c.l.b16 %v440
    %v512 = vunpack.c.l.b16 %v441
    %v513 = vunpack.c.l.b16 %v442
    %v514 = vunpack.c.l.b16 %v443
    %v515 = vunpack.c.l.b16 %v444
    %v516 = vunpack.c.l.b16 %v445
    %v517 = vpack.c.b16 %v486, %v485
    %v518 = vpack.c.b16 %v488, %v487
    %v519 = vpack.c.b16 %v490, %v489
    %v520 = vpack.c.b16 %v492, %v491
    %v521 = vpack.c.b16 %v494, %v493
    %v522 = vpack.c.b16 %v496, %v495
    %v523 = vpack.c.b16 %v498, %v497
    %v524 = vpack.c.b16 %v500, %v499
    %v525 = vpack.c.b16 %v502, %v501
    %v526 = vpack.c.b16 %v504, %v503
    %v527 = vpack.c.b16 %v506, %v505
    %v528 = vpack.c.b16 %v508, %v507
    %v529 = vpack.c.b16 %v510, %v509
    %v530 = vpack.c.b16 %v512, %v511
    %v531 = vpack.c.b16 %v514, %v513
    %v532 = vpack.c.b16 %v516, %v515
    %549 = vmatprep.subr.bf16.mxu0 0
    %550 = vmatpush1.bf16.msra.mxu0 %v517
    %551 = vmatprep.subr.bf16.mxu0 0
    %552 = vmatpush1.bf16.msra.mxu0 %v518
    %553 = vmatprep.subr.bf16.mxu0 0
    %554 = vmatpush1.bf16.msra.mxu0 %v519
    %555 = vmatprep.subr.bf16.mxu0 0
    %556 = vmatpush1.bf16.msra.mxu0 %v520
    %557 = vmatprep.subr.bf16.mxu0 0
    %558 = vmatpush1.bf16.msra.mxu0 %v521
    %559 = vmatprep.subr.bf16.mxu0 0
    %560 = vmatpush1.bf16.msra.mxu0 %v522
    %561 = vmatprep.subr.bf16.mxu0 0
    %562 = vmatpush1.bf16.msra.mxu0 %v523
    %563 = vmatprep.subr.bf16.mxu0 0
    %564 = vmatpush1.bf16.msra.mxu0 %v524
    %565 = vmatprep.subr.bf16.mxu0 0
    %566 = vmatpush1.bf16.msra.mxu0 %v525
    %567 = vmatprep.subr.bf16.mxu0 0
    %568 = vmatpush1.bf16.msra.mxu0 %v526
    %569 = vmatprep.subr.bf16.mxu0 0
    %570 = vmatpush1.bf16.msra.mxu0 %v527
    %571 = vmatprep.subr.bf16.mxu0 0
    %572 = vmatpush1.bf16.msra.mxu0 %v528
    %573 = vmatprep.subr.bf16.mxu0 0
    %574 = vmatpush1.bf16.msra.mxu0 %v529
    %575 = vmatprep.subr.bf16.mxu0 0
    %576 = vmatpush1.bf16.msra.mxu0 %v530
    %577 = vmatprep.subr.bf16.mxu0 0
    %578 = vmatpush1.bf16.msra.mxu0 %v531
    %579 = vmatprep.subr.bf16.mxu0 0
    %580 = vmatpush1.bf16.msra.mxu0 %v532
    %581 = vmatprep.mubr.bf16.mxu0 %v197
    %582 = vmatmul.mubr.bf16.gmra.mrb[0].mxu0 %v406
    %v583 = vpop.f32.mrb[0].mxu0
    %v584 = vadd.f32 %v451, %v583
    %v585 = vpop.f32.mrb[0].mxu0
    %v586 = vpop.f32.mrb[0].mxu0
    %v587 = vadd.f32 %v451, %v586
    %v588 = vpop.f32.mrb[0].mxu0
    %589 = vmatprep.mubr.bf16.mxu0 %v198
    %590 = vmatmul.mubr.bf16.gmra.mrb[0].mxu0 %v407
    %v591 = vpop.f32.mrb[0].mxu0
    %v592 = vadd.f32 %v451, %v591
    %v593 = vpop.f32.mrb[0].mxu0
    %v594 = vpop.f32.mrb[0].mxu0
    %v595 = vadd.f32 %v451, %v594
    %v596 = vpop.f32.mrb[0].mxu0
    %597 = vmatprep.mubr.bf16.mxu0 %v199
    %598 = vmatmul.mubr.bf16.gmra.mrb[0].mxu0 %v408
    %v599 = vpop.f32.mrb[0].mxu0
    %v600 = vadd.f32 %v451, %v599
    %v601 = vpop.f32.mrb[0].mxu0
    %v602 = vpop.f32.mrb[0].mxu0
    %v603 = vadd.f32 %v451, %v602
    %v604 = vpop.f32.mrb[0].mxu0
    %605 = vmatprep.mubr.bf16.mxu0 %v200
    %606 = vmatmul.mubr.bf16.gmra.mrb[0].mxu0 %v409
    %v607 = vpop.f32.mrb[0].mxu0
    %v608 = vadd.f32 %v451, %v607
    %v609 = vpop.f32.mrb[0].mxu0
    %v610 = vpop.f32.mrb[0].mxu0
    %v611 = vadd.f32 %v451, %v610
    %v612 = vpop.f32.mrb[0].mxu0
    %613 = vmatprep.mubr.bf16.mxu0 %v201
    %614 = vmatmul.mubr.bf16.gmra.mrb[0].mxu0 %v410
    %v615 = vpop.f32.mrb[0].mxu0
    %v616 = vadd.f32 %v451, %v615
    %v617 = vpop.f32.mrb[0].mxu0
    %v618 = vpop.f32.mrb[0].mxu0
    %v619 = vadd.f32 %v451, %v618
    %v620 = vpop.f32.mrb[0].mxu0
    %621 = vmatprep.mubr.bf16.mxu0 %v202
    %622 = vmatmul.mubr.bf16.gmra.mrb[0].mxu0 %v411
    %v623 = vpop.f32.mrb[0].mxu0
    %v624 = vadd.f32 %v451, %v623
    %v625 = vpop.f32.mrb[0].mxu0
    %v626 = vpop.f32.mrb[0].mxu0
    %v627 = vadd.f32 %v451, %v626
    %v628 = vpop.f32.mrb[0].mxu0
    %629 = vmatprep.mubr.bf16.mxu0 %v203
    %630 = vmatmul.mubr.bf16.gmra.mrb[0].mxu0 %v412
    %v631 = vpop.f32.mrb[0].mxu0
    %v632 = vadd.f32 %v451, %v631
    %v633 = vpop.f32.mrb[0].mxu0
    %v634 = vpop.f32.mrb[0].mxu0
    %v635 = vadd.f32 %v451, %v634
    %v636 = vpop.f32.mrb[0].mxu0
    %637 = vmatprep.mubr.bf16.mxu0 %v204
    %638 = vmatmul.mubr.bf16.gmra.mrb[0].mxu0 %v413
    %v639 = vpop.f32.mrb[0].mxu0
    %v640 = vadd.f32 %v451, %v639
    %v641 = vpop.f32.mrb[0].mxu0
    %v642 = vpop.f32.mrb[0].mxu0
    %v643 = vadd.f32 %v451, %v642
    %v644 = vpop.f32.mrb[0].mxu0
    %645 = vdwg.mxu0
    %v646 = vmax.f32 %v584, 0.0
    %v647 = vmax.f32 %v587, 0.0
    %v648 = vmax.f32 %v592, 0.0
    %v649 = vmax.f32 %v595, 0.0
    %v650 = vmax.f32 %v600, 0.0
    %v651 = vmax.f32 %v603, 0.0
    %v652 = vmax.f32 %v608, 0.0
    %v653 = vmax.f32 %v611, 0.0
    %v654 = vmax.f32 %v616, 0.0
    %v655 = vmax.f32 %v619, 0.0
    %v656 = vmax.f32 %v624, 0.0
    %v657 = vmax.f32 %v627, 0.0
    %v658 = vmax.f32 %v632, 0.0
    %v659 = vmax.f32 %v635, 0.0
    %v660 = vmax.f32 %v640, 0.0
    %v661 = vmax.f32 %v643, 0.0
    %v662 = vpack.c.bf16 %v647, %v646
    %v663 = vpack.c.bf16 %v649, %v648
    %v664 = vpack.c.bf16 %v651, %v650
    %v665 = vpack.c.bf16 %v653, %v652
    %v666 = vpack.c.bf16 %v655, %v654
    %v667 = vpack.c.bf16 %v657, %v656
    %v668 = vpack.c.bf16 %v659, %v658
    %v669 = vpack.c.bf16 %v661, %v660
    %670 = vmatprep.subr.bf16.mxu0 0
    %671 = vmatpush1.bf16.msra.mxu0 %v662
    %672 = vmatprep.subr.bf16.mxu0 0
    %673 = vmatpush1.bf16.msra.mxu0 %v663
    %674 = vmatprep.subr.bf16.mxu0 0
    %675 = vmatpush1.bf16.msra.mxu0 %v664
    %676 = vmatprep.subr.bf16.mxu0 0
    %677 = vmatpush1.bf16.msra.mxu0 %v665
    %678 = vmatprep.subr.bf16.mxu0 0
    %679 = vmatpush1.bf16.msra.mxu0 %v666
    %680 = vmatprep.subr.bf16.mxu0 0
    %681 = vmatpush1.bf16.msra.mxu0 %v667
    %682 = vmatprep.subr.bf16.mxu0 0
    %683 = vmatpush1.bf16.msra.mxu0 %v668
    %684 = vmatprep.subr.bf16.mxu0 0
    %685 = vmatpush1.bf16.msra.mxu0 %v669
    %686 = vmatprep.subr.bf16.mxu0 0
    %687 = vmatpush1.bf16.msra.mxu0 0
    %688 = vmatprep.subr.bf16.mxu0 0
    %689 = vmatpush1.bf16.msra.mxu0 0
    %690 = vmatprep.subr.bf16.mxu0 0
    %691 = vmatpush1.bf16.msra.mxu0 0
    %692 = vmatprep.subr.bf16.mxu0 0
    %693 = vmatpush1.bf16.msra.mxu0 0
    %694 = vmatprep.subr.bf16.mxu0 0
    %695 = vmatpush1.bf16.msra.mxu0 0
    %696 = vmatprep.subr.bf16.mxu0 0
    %697 = vmatpush1.bf16.msra.mxu0 0
    %698 = vmatprep.subr.bf16.mxu0 0
    %699 = vmatpush1.bf16.msra.mxu0 0
    %700 = vmatprep.subr.bf16.mxu0 0
    %701 = vmatpush1.bf16.msra.mxu0 0
    %702 = vmatprep.mubr.bf16.mxu0 0
    %703 = vmatmul.mubr.bf16.gmra.mrb[0].mxu0 %v149
    %v704 = vpop.f32.mrb[0].mxu0
    %v705 = vadd.f32 0.0, %v704
    %v706 = vpop.f32.mrb[0].mxu0
    %v707 = vpop.f32.mrb[0].mxu0
    %v708 = vadd.f32 0.0, %v707
    %v709 = vpop.f32.mrb[0].mxu0
    %710 = vmatprep.mubr.bf16.mxu0 0
    %711 = vmatmul.mubr.bf16.gmra.mrb[0].mxu0 %v150
    %v712 = vpop.f32.mrb[0].mxu0
    %v713 = vadd.f32 0.0, %v712
    %v714 = vpop.f32.mrb[0].mxu0
    %v715 = vpop.f32.mrb[0].mxu0
    %v716 = vadd.f32 0.0, %v715
    %v717 = vpop.f32.mrb[0].mxu0
    %718 = vmatprep.mubr.bf16.mxu0 0
    %719 = vmatmul.mubr.bf16.gmra.mrb[0].mxu0 %v151
    %v720 = vpop.f32.mrb[0].mxu0
    %v721 = vadd.f32 0.0, %v720
    %v722 = vpop.f32.mrb[0].mxu0
    %v723 = vpop.f32.mrb[0].mxu0
    %v724 = vadd.f32 0.0, %v723
    %v725 = vpop.f32.mrb[0].mxu0
    %726 = vmatprep.mubr.bf16.mxu0 0
    %727 = vmatmul.mubr.bf16.gmra.mrb[0].mxu0 %v152
    %v728 = vpop.f32.mrb[0].mxu0
    %v729 = vadd.f32 0.0, %v728
    %v730 = vpop.f32.mrb[0].mxu0
    %v731 = vpop.f32.mrb[0].mxu0
    %v732 = vadd.f32 0.0, %v731
    %v733 = vpop.f32.mrb[0].mxu0
    %734 = vmatprep.mubr.bf16.mxu0 0
    %735 = vmatmul.mubr.bf16.gmra.mrb[0].mxu0 %v153
    %v736 = vpop.f32.mrb[0].mxu0
    %v737 = vadd.f32 0.0, %v736
    %v738 = vpop.f32.mrb[0].mxu0
    %v739 = vpop.f32.mrb[0].mxu0
    %v740 = vadd.f32 0.0, %v739
    %v741 = vpop.f32.mrb[0].mxu0
    %742 = vmatprep.mubr.bf16.mxu0 0
    %743 = vmatmul.mubr.bf16.gmra.mrb[0].mxu0 %v154
    %v744 = vpop.f32.mrb[0].mxu0
    %v745 = vadd.f32 0.0, %v744
    %v746 = vpop.f32.mrb[0].mxu0
    %v747 = vpop.f32.mrb[0].mxu0
    %v748 = vadd.f32 0.0, %v747
    %v749 = vpop.f32.mrb[0].mxu0
    %750 = vmatprep.mubr.bf16.mxu0 0
    %751 = vmatmul.mubr.bf16.gmra.mrb[0].mxu0 %v155
    %v752 = vpop.f32.mrb[0].mxu0
    %v753 = vadd.f32 0.0, %v752
    %v754 = vpop.f32.mrb[0].mxu0
    %v755 = vpop.f32.mrb[0].mxu0
    %v756 = vadd.f32 0.0, %v755
    %v757 = vpop.f32.mrb[0].mxu0
    %758 = vmatprep.mubr.bf16.mxu0 0
    %759 = vmatmul.mubr.bf16.gmra.mrb[0].mxu0 %v156
    %v760 = vpop.f32.mrb[0].mxu0
    %v761 = vadd.f32 0.0, %v760
    %v762 = vpop.f32.mrb[0].mxu0
    %v763 = vpop.f32.mrb[0].mxu0
    %v764 = vadd.f32 0.0, %v763
    %v765 = vpop.f32.mrb[0].mxu0
    %766 = vdwg.mxu0
    %v767 = vmul.f32 %v705, %v313
    %v768 = vmul.f32 %v708, %v318
    %v769 = vmul.f32 %v713, %v323
    %v770 = vmul.f32 %v716, %v328
    %v771 = vmul.f32 %v721, %v333
    %v772 = vmul.f32 %v724, %v338
    %v773 = vmul.f32 %v729, %v343
    %v774 = vmul.f32 %v732, %v348
    %v775 = vmul.f32 %v737, %v353
    %v776 = vmul.f32 %v740, %v358
    %v777 = vmul.f32 %v745, %v363
    %v778 = vmul.f32 %v748, %v368
    %v779 = vmul.f32 %v753, %v373
    %v780 = vmul.f32 %v756, %v378
    %v781 = vmul.f32 %v761, %v383
    %v782 = vmul.f32 %v764, %v388
    %v783 = vpack.c.bf16 %v768, %v767
    %v784 = vpack.c.bf16 %v770, %v769
    %v785 = vpack.c.bf16 %v772, %v771
    %v786 = vpack.c.bf16 %v774, %v773
    %v787 = vpack.c.bf16 %v776, %v775
    %v788 = vpack.c.bf16 %v778, %v777
    %v789 = vpack.c.bf16 %v780, %v779
    %v790 = vpack.c.bf16 %v782, %v781
    %v791 = vld [vmem:[#allocation7] sm:$0xf]
    %v792 = vld [vmem:[#allocation7 + $0x4] sm:$0xf]
    %v793 = vld [vmem:[#allocation7 + $0x8] sm:$0xf]
    %v794 = vld [vmem:[#allocation7 + $0xc] sm:$0xf]
    %v795 = vld [vmem:[#allocation7 + $0x10] sm:$0xf]
    %v796 = vld [vmem:[#allocation7 + $0x14] sm:$0xf]
    %v797 = vld [vmem:[#allocation7 + $0x18] sm:$0xf]
    %v798 = vld [vmem:[#allocation7 + $0x1c] sm:$0xf]
    %v799 = vld [vmem:[#allocation7 + $0x20] sm:$0xf]
    %v800 = vld [vmem:[#allocation7 + $0x24] sm:$0xf]
    %v801 = vld [vmem:[#allocation7 + $0x28] sm:$0xf]
    %v802 = vld [vmem:[#allocation7 + $0x2c] sm:$0xf]
    %v803 = vld [vmem:[#allocation7 + $0x30] sm:$0xf]
    %v804 = vld [vmem:[#allocation7 + $0x34] sm:$0xf]
    %v805 = vld [vmem:[#allocation7 + $0x38] sm:$0xf]
    %v806 = vld [vmem:[#allocation7 + $0x3c] sm:$0xf]
    %v807 = vld [vmem:[#allocation7 + $0x40] sm:$0xf]
    %v808 = vld [vmem:[#allocation7 + $0x44] sm:$0xf]
    %v809 = vld [vmem:[#allocation7 + $0x48] sm:$0xf]
    %v810 = vld [vmem:[#allocation7 + $0x4c] sm:$0xf]
    %v811 = vld [vmem:[#allocation7 + $0x50] sm:$0xf]
    %v812 = vld [vmem:[#allocation7 + $0x54] sm:$0xf]
    %v813 = vld [vmem:[#allocation7 + $0x58] sm:$0xf]
    %v814 = vld [vmem:[#allocation7 + $0x5c] sm:$0xf]
    %v815 = vld [vmem:[#allocation7 + $0x60] sm:$0xf]
    %v816 = vld [vmem:[#allocation7 + $0x64] sm:$0xf]
    %v817 = vld [vmem:[#allocation7 + $0x68] sm:$0xf]
    %v818 = vld [vmem:[#allocation7 + $0x6c] sm:$0xf]
    %v819 = vld [vmem:[#allocation7 + $0x70] sm:$0xf]
    %v820 = vld [vmem:[#allocation7 + $0x74] sm:$0xf]
    %v821 = vld [vmem:[#allocation7 + $0x78] sm:$0xf]
    %v822 = vld [vmem:[#allocation7 + $0x7c] sm:$0xf]
    %v823 = vld [vmem:[%s6] sm:$0x1]
    %v825 = vlaneseq
    %v826 = vshrl.u32 %v825, 7
    %v827 = vsub.s32 0, %v826
    %v828 = vrot.slane %v823, %v827
    %v862 = vunpack.c.l.b16 %v791
    %v863 = vunpack.c.l.b16 %v792
    %v864 = vunpack.c.l.b16 %v793
    %v865 = vunpack.c.l.b16 %v794
    %v866 = vunpack.c.l.b16 %v795
    %v867 = vunpack.c.l.b16 %v796
    %v868 = vunpack.c.l.b16 %v797
    %v869 = vunpack.c.l.b16 %v798
    %v870 = vunpack.c.l.b16 %v799
    %v871 = vunpack.c.l.b16 %v800
    %v872 = vunpack.c.l.b16 %v801
    %v873 = vunpack.c.l.b16 %v802
    %v874 = vunpack.c.l.b16 %v803
    %v875 = vunpack.c.l.b16 %v804
    %v876 = vunpack.c.l.b16 %v805
    %v877 = vunpack.c.l.b16 %v806
    %v878 = vunpack.c.l.b16 %v807
    %v879 = vunpack.c.l.b16 %v808
    %v880 = vunpack.c.l.b16 %v809
    %v881 = vunpack.c.l.b16 %v810
    %v882 = vunpack.c.l.b16 %v811
    %v883 = vunpack.c.l.b16 %v812
    %v884 = vunpack.c.l.b16 %v813
    %v885 = vunpack.c.l.b16 %v814
    %v886 = vunpack.c.l.b16 %v815
    %v887 = vunpack.c.l.b16 %v816
    %v888 = vunpack.c.l.b16 %v817
    %v889 = vunpack.c.l.b16 %v818
    %v890 = vunpack.c.l.b16 %v819
    %v891 = vunpack.c.l.b16 %v820
    %v892 = vunpack.c.l.b16 %v821
    %v893 = vunpack.c.l.b16 %v822
    %v894 = vpack.c.b16 %v863, %v862
    %v895 = vpack.c.b16 %v865, %v864
    %v896 = vpack.c.b16 %v867, %v866
    %v897 = vpack.c.b16 %v869, %v868
    %v898 = vpack.c.b16 %v871, %v870
    %v899 = vpack.c.b16 %v873, %v872
    %v900 = vpack.c.b16 %v875, %v874
    %v901 = vpack.c.b16 %v877, %v876
    %v902 = vpack.c.b16 %v879, %v878
    %v903 = vpack.c.b16 %v881, %v880
    %v904 = vpack.c.b16 %v883, %v882
    %v905 = vpack.c.b16 %v885, %v884
    %v906 = vpack.c.b16 %v887, %v886
    %v907 = vpack.c.b16 %v889, %v888
    %v908 = vpack.c.b16 %v891, %v890
    %v909 = vpack.c.b16 %v893, %v892
    %926 = vmatprep.subr.bf16.mxu0 0
    %927 = vmatpush1.bf16.msra.mxu0 %v894
    %928 = vmatprep.subr.bf16.mxu0 0
    %929 = vmatpush1.bf16.msra.mxu0 %v895
    %930 = vmatprep.subr.bf16.mxu0 0
    %931 = vmatpush1.bf16.msra.mxu0 %v896
    %932 = vmatprep.subr.bf16.mxu0 0
    %933 = vmatpush1.bf16.msra.mxu0 %v897
    %934 = vmatprep.subr.bf16.mxu0 0
    %935 = vmatpush1.bf16.msra.mxu0 %v898
    %936 = vmatprep.subr.bf16.mxu0 0
    %937 = vmatpush1.bf16.msra.mxu0 %v899
    %938 = vmatprep.subr.bf16.mxu0 0
    %939 = vmatpush1.bf16.msra.mxu0 %v900
    %940 = vmatprep.subr.bf16.mxu0 0
    %941 = vmatpush1.bf16.msra.mxu0 %v901
    %942 = vmatprep.subr.bf16.mxu0 0
    %943 = vmatpush1.bf16.msra.mxu0 %v902
    %944 = vmatprep.subr.bf16.mxu0 0
    %945 = vmatpush1.bf16.msra.mxu0 %v903
    %946 = vmatprep.subr.bf16.mxu0 0
    %947 = vmatpush1.bf16.msra.mxu0 %v904
    %948 = vmatprep.subr.bf16.mxu0 0
    %949 = vmatpush1.bf16.msra.mxu0 %v905
    %950 = vmatprep.subr.bf16.mxu0 0
    %951 = vmatpush1.bf16.msra.mxu0 %v906
    %952 = vmatprep.subr.bf16.mxu0 0
    %953 = vmatpush1.bf16.msra.mxu0 %v907
    %954 = vmatprep.subr.bf16.mxu0 0
    %955 = vmatpush1.bf16.msra.mxu0 %v908
    %956 = vmatprep.subr.bf16.mxu0 0
    %957 = vmatpush1.bf16.msra.mxu0 %v909
    %958 = vmatprep.mubr.bf16.mxu0 %v662
    %959 = vmatmul.mubr.bf16.gmra.mrb[0].mxu0 %v783
    %v960 = vpop.f32.mrb[0].mxu0
    %v961 = vadd.f32 %v828, %v960
    %v962 = vpop.f32.mrb[0].mxu0
    %v963 = vpop.f32.mrb[0].mxu0
    %v964 = vadd.f32 %v828, %v963
    %v965 = vpop.f32.mrb[0].mxu0
    %966 = vmatprep.mubr.bf16.mxu0 %v663
    %967 = vmatmul.mubr.bf16.gmra.mrb[0].mxu0 %v784
    %v968 = vpop.f32.mrb[0].mxu0
    %v969 = vadd.f32 %v828, %v968
    %v970 = vpop.f32.mrb[0].mxu0
    %v971 = vpop.f32.mrb[0].mxu0
    %v972 = vadd.f32 %v828, %v971
    %v973 = vpop.f32.mrb[0].mxu0
    %974 = vmatprep.mubr.bf16.mxu0 %v664
    %975 = vmatmul.mubr.bf16.gmra.mrb[0].mxu0 %v785
    %v976 = vpop.f32.mrb[0].mxu0
    %v977 = vadd.f32 %v828, %v976
    %v978 = vpop.f32.mrb[0].mxu0
    %v979 = vpop.f32.mrb[0].mxu0
    %v980 = vadd.f32 %v828, %v979
    %v981 = vpop.f32.mrb[0].mxu0
    %982 = vmatprep.mubr.bf16.mxu0 %v665
    %983 = vmatmul.mubr.bf16.gmra.mrb[0].mxu0 %v786
    %v984 = vpop.f32.mrb[0].mxu0
    %v985 = vadd.f32 %v828, %v984
    %v986 = vpop.f32.mrb[0].mxu0
    %v987 = vpop.f32.mrb[0].mxu0
    %v988 = vadd.f32 %v828, %v987
    %v989 = vpop.f32.mrb[0].mxu0
    %990 = vmatprep.mubr.bf16.mxu0 %v666
    %991 = vmatmul.mubr.bf16.gmra.mrb[0].mxu0 %v787
    %v992 = vpop.f32.mrb[0].mxu0
    %v993 = vadd.f32 %v828, %v992
    %v994 = vpop.f32.mrb[0].mxu0
    %v995 = vpop.f32.mrb[0].mxu0
    %v996 = vadd.f32 %v828, %v995
    %v997 = vpop.f32.mrb[0].mxu0
    %998 = vmatprep.mubr.bf16.mxu0 %v667
    %999 = vmatmul.mubr.bf16.gmra.mrb[0].mxu0 %v788
    %v1000 = vpop.f32.mrb[0].mxu0
    %v1001 = vadd.f32 %v828, %v1000
    %v1002 = vpop.f32.mrb[0].mxu0
    %v1003 = vpop.f32.mrb[0].mxu0
    %v1004 = vadd.f32 %v828, %v1003
    %v1005 = vpop.f32.mrb[0].mxu0
    %1006 = vmatprep.mubr.bf16.mxu0 %v668
    %1007 = vmatmul.mubr.bf16.gmra.mrb[0].mxu0 %v789
    %v1008 = vpop.f32.mrb[0].mxu0
    %v1009 = vadd.f32 %v828, %v1008
    %v1010 = vpop.f32.mrb[0].mxu0
    %v1011 = vpop.f32.mrb[0].mxu0
    %v1012 = vadd.f32 %v828, %v1011
    %v1013 = vpop.f32.mrb[0].mxu0
    %1014 = vmatprep.mubr.bf16.mxu0 %v669
    %1015 = vmatmul.mubr.bf16.gmra.mrb[0].mxu0 %v790
    %v1016 = vpop.f32.mrb[0].mxu0
    %v1017 = vadd.f32 %v828, %v1016
    %v1018 = vpop.f32.mrb[0].mxu0
    %v1019 = vpop.f32.mrb[0].mxu0
    %v1020 = vadd.f32 %v828, %v1019
    %v1021 = vpop.f32.mrb[0].mxu0
    %1022 = vdwg.mxu0
    %1023 = vst [vmem:[#allocation8] sm:$0xff] %v961
    %1024 = vst [vmem:[#allocation8 + $0x8] sm:$0xff] %v964
    %1025 = vst [vmem:[#allocation8 + $0x10] sm:$0xff] %v969
    %1026 = vst [vmem:[#allocation8 + $0x18] sm:$0xff] %v972
    %1027 = vst [vmem:[#allocation8 + $0x20] sm:$0xff] %v977
    %1028 = vst [vmem:[#allocation8 + $0x28] sm:$0xff] %v980
    %1029 = vst [vmem:[#allocation8 + $0x30] sm:$0xff] %v985
    %1030 = vst [vmem:[#allocation8 + $0x38] sm:$0xff] %v988
    %1031 = vst [vmem:[#allocation8 + $0x40] sm:$0xff] %v993
    %1032 = vst [vmem:[#allocation8 + $0x48] sm:$0xff] %v996
    %1033 = vst [vmem:[#allocation8 + $0x50] sm:$0xff] %v1001
    %1034 = vst [vmem:[#allocation8 + $0x58] sm:$0xff] %v1004
    %1035 = vst [vmem:[#allocation8 + $0x60] sm:$0xff] %v1009
    %1036 = vst [vmem:[#allocation8 + $0x68] sm:$0xff] %v1012
    %1037 = vst [vmem:[#allocation8 + $0x70] sm:$0xff] %v1017
    %1038 = vst [vmem:[#allocation8 + $0x78] sm:$0xff] %v1020
    // Predicated region
    $region42: #{tpu_custom_call.1} parent=1 // pred_check
      _
    $region43: #{tpu_custom_call.1} parent=1 // pred_check_branch
      %1040 = sbr.rel (0) target = $region45
    $region44: #{tpu_custom_call.1} parent=1 // pred_region
      %s1042 = ssub.s32 2048, 2048
      %1043 = vsyncadd [#allocation4], %s1042
      %s1044 = sshll.u32 [#allocation8], 4
      %s1045 = int_to_ptr.vmem [resolvable:$true] %s1044
      %1050 = dma.vmem_to_hbm [thread:$0]  %s1045, 2048, %s7, [#allocation4], 128, 128, 8
    $region45: #{tpu_custom_call.1} parent=1 // pred_fallthru
      _
    // Predicated region
    $region46: #{tpu_custom_call.1} parent=1 // pred_check
      _
    $region47: #{tpu_custom_call.1} parent=1 // pred_check_branch
      %1052 = sbr.rel (0) target = $region49
    $region48: #{tpu_custom_call.1} parent=1 // pred_region
      %1053 = dma.done [#allocation4], 2048
    $region49: #{tpu_custom_call.1} parent=1 // pred_fallthru
      _
    %1054 = vsyncpa [#allocation3], 1
    %1055 = vsyncpa [#allocation6], 1
    %1056 = vsyncpa [#allocation4], 1

</llo_original>
